<compile_context>
chip_gen: v5e
topology: v5e:2x2
jax: 0.10.0
libtpu: 0.0.40
codegen_flags: <defaults>
</compile_context>

<pallas_src>
import functools

import jax
import jax.numpy as jnp
from jax.experimental import pallas as pl
from jax.experimental.pallas import tpu as pltpu

HIDDEN = 8       # hidden width of the first Linear
INPUT_SIZE = 6   # module input features


def _mlp_kernel(x_ref, w1_ref, b1_ref, w2_ref, b2_ref, o_ref):
    # x_ref:  (TILE_B, 6)   native PyTorch layout block (batch on sublanes)
    # w1_ref: (HIDDEN, 6)   PyTorch Linear(6, 8).weight
    # b1_ref: (HIDDEN, 1)
    # w2_ref: (HIDDEN, 1)   PyTorch Linear(8, 1).weight, transposed
    # b2_ref: (1,)          SMEM scalar
    # o_ref:  (1, TILE_B)   lane-dense output block
    #
    # First Linear as W1 @ x^T on the MXU (flash-attention-style contraction on
    # the last dim of both operands): the batch moves onto the lane axis here,
    # which replaces the old wrapper-side transpose/pad pass over x.
    h = jax.lax.dot_general(
        w1_ref[...], x_ref[...],
        dimension_numbers=(((1,), (1,)), ((), ())),
        preferred_element_type=jnp.float32,
    )                                                    # (HIDDEN, TILE_B)
    h = jnp.maximum(h + b1_ref[...], 0.0)                # bias + ReLU (VPU)
    # Linear(8, 1): broadcast-mul + sublane reduce (VPU/XLU), not an N=1 matmul.
    z = jnp.sum(h * w2_ref[...], axis=0, keepdims=True) + b2_ref[0]
    o_ref[...] = jax.nn.sigmoid(z).astype(o_ref.dtype)   # (1, TILE_B)


def _round_up(n, m):
    return ((n + m - 1) // m) * m


@functools.partial(jax.jit, static_argnames=("tile_b",))
def binary_claim_verification_forward(x, w1, b1, w2, b2, *, tile_b=8192):
    """Forward pass.

    x:  (B, 6) float32   (same layout as the PyTorch module input)
    w1: (8, 6) float32   (PyTorch Linear(6, 8).weight, as stored by PyTorch)
    b1: (8,)   float32
    w2: (1, 8) float32   (PyTorch Linear(8, 1).weight, as stored by PyTorch)
    b2: (1,)   float32
    returns (B, 1) float32
    """
    B, d_in = x.shape

    # Tile sizing.  The native (tile, d_in) f32 block is lane-padded to 128 in
    # VMEM (512 B per row), so double-buffered input + in-kernel temporaries
    # cost ~1.5 KiB per row: tile=8192 ~ 13 MiB, tile=16384 ~ 26 MiB.  tile=8192
    # already moves ~224 KiB of useful HBM bytes per grid step, amortizing the
    # ~0.35 us per-step overhead; sweep tile_b to 16384 (fits the 48 MiB VMEM
    # limit below) if a trace shows the pipeline is still overhead-bound.
    if B <= 256:
        tile = B                 # single full-array block, no alignment needed
    else:
        # >= 2 grid steps so the "parallel" batch axis can use both v7x cores.
        tile = max(128, min(tile_b, _round_up(pl.cdiv(B, 2), 128)))
    b_pad = _round_up(B, tile)
    num_tiles = b_pad // tile

    # Zero-copy fast path when B divides into tiles; otherwise pad the batch
    # (Pallas VMEM refs are not bounds-checked, so no unguarded tail tile).
    # TODO(synk): the ragged-B pad is a full copy of x; it could be removed by
    # letting the final grid step read/write a partial block.
    x_in = x if b_pad == B else jnp.pad(x, ((0, b_pad - B), (0, 0)))

    w1c = w1.astype(jnp.float32)                        # (8, 6)
    b1c = b1.reshape(HIDDEN, 1).astype(jnp.float32)
    w2c = w2.reshape(HIDDEN, 1).astype(jnp.float32)     # (1, 8) -> (8, 1)
    b2s = b2.reshape(1).astype(jnp.float32)

    cost = pl.CostEstimate(
        flops=2 * b_pad * (d_in * HIDDEN + HIDDEN) + 4 * b_pad,
        transcendentals=b_pad,                                   # sigmoid exp
        bytes_accessed=b_pad * (d_in + 1) * 4
        + 4 * (HIDDEN * d_in + HIDDEN + HIDDEN + 1),
    )

    out = pl.pallas_call(
        _mlp_kernel,
        out_shape=jax.ShapeDtypeStruct((1, b_pad), jnp.float32),
        grid=(num_tiles,),
        in_specs=[
            pl.BlockSpec((tile, d_in), lambda i: (i, 0)),       # x tile (pipelined)
            pl.BlockSpec((HIDDEN, d_in), lambda i: (0, 0)),     # w1 (VMEM-resident)
            pl.BlockSpec((HIDDEN, 1), lambda i: (0, 0)),        # b1 (VMEM-resident)
            pl.BlockSpec((HIDDEN, 1), lambda i: (0, 0)),        # w2 (VMEM-resident)
            pl.BlockSpec(memory_space=pltpu.MemorySpace.SMEM),  # b2 scalar in SMEM
        ],
        out_specs=pl.BlockSpec((1, tile), lambda i: (0, i)),
        compiler_params=pltpu.CompilerParams(
            dimension_semantics=("parallel",),
            vmem_limit_bytes=48 * 1024 * 1024,
        ),
        cost_estimate=cost,
        # TODO(synk): if a trace still shows exposed DMA issue latency at step
        # boundaries, add pipeline_mode=pl.Buffered(3) to the x BlockSpec.
    )(x_in, w1c, b1c, w2c, b2s)

    return out[0, :B].reshape(B, 1)


def _reference_forward(x, w1, b1, w2, b2):
    h = jnp.maximum(x @ w1.T + b1, 0.0)
    return jax.nn.sigmoid(h @ w2.T + b2)


if __name__ == "__main__":
    key = jax.random.PRNGKey(0)
    kx, k1, k2, k3, k4 = jax.random.split(key, 5)

    B = 8
    x = jax.random.normal(kx, (B, INPUT_SIZE), jnp.float32)
    # PyTorch-native parameter layouts: Linear(6,8).weight=(8,6), Linear(8,1).weight=(1,8)
    w1 = jax.random.uniform(k1, (HIDDEN, INPUT_SIZE), jnp.float32, -0.5, 0.5)
    b1 = jax.random.uniform(k2, (HIDDEN,), jnp.float32, -0.5, 0.5)
    w2 = jax.random.uniform(k3, (1, HIDDEN), jnp.float32, -0.5, 0.5)
    b2 = jax.random.uniform(k4, (1,), jnp.float32, -0.5, 0.5)

    # Small-batch check (single full-array block, B=8).
    y = jax.block_until_ready(binary_claim_verification_forward(x, w1, b1, w2, b2))
    y_ref = _reference_forward(x, w1, b1, w2, b2)
    assert y.shape == (B, 1), y.shape
    assert jnp.allclose(y, y_ref, atol=1e-5, rtol=1e-5), (y, y_ref)

    # Multi-tile + ragged-batch check (B=1000 padded to 4 x 256-row tiles).
    B2 = 1000
    x2 = jax.random.normal(jax.random.PRNGKey(1), (B2, INPUT_SIZE), jnp.float32)
    y2 = jax.block_until_ready(
        binary_claim_verification_forward(x2, w1, b1, w2, b2, tile_b=256))
    y2_ref = _reference_forward(x2, w1, b1, w2, b2)
    assert y2.shape == (B2, 1), y2.shape
    assert jnp.allclose(y2, y2_ref, atol=1e-5, rtol=1e-5)

    # Default-tile check: zero-copy path, 2 x 8192-row tiles (>= 2 steps for v7x).
    B3 = 16384
    x3 = jax.random.normal(jax.random.PRNGKey(2), (B3, INPUT_SIZE), jnp.float32)
    y3 = jax.block_until_ready(binary_claim_verification_forward(x3, w1, b1, w2, b2))
    y3_ref = _reference_forward(x3, w1, b1, w2, b2)
    assert y3.shape == (B3, 1), y3.shape
    assert jnp.allclose(y3, y3_ref, atol=1e-5, rtol=1e-5)

    print("KERNEL_OK")
</pallas_src>

<mosaic_0001>
module attributes {stable_mosaic.version = 11 : i64} {
  func.func @_mlp_kernel(%arg0: i32, %arg1: memref<8x6xf32, #tpu.memory_space<vmem>>, %arg2: memref<8x6xf32, #tpu.memory_space<vmem>>, %arg3: memref<8x1xf32, #tpu.memory_space<vmem>>, %arg4: memref<8x1xf32, #tpu.memory_space<vmem>>, %arg5: memref<1xf32, #tpu.memory_space<smem>>, %arg6: memref<1x8xf32, #tpu.memory_space<vmem>>) attributes {dimension_semantics = [#tpu.dimension_semantics<parallel>], iteration_bounds = array<i64: 1>, scalar_prefetch = 0 : i64, scratch_operands = 0 : i64, tpu.core_type = #tpu.core_type<tc>, window_params = [{transform_indices = @transform_0, window_bounds = array<i64: 8, 6>}, {pipeline_mode = #tpu.pipeline_mode<synchronous>, transform_indices = @transform_1, window_bounds = array<i64: 8, 6>}, {pipeline_mode = #tpu.pipeline_mode<synchronous>, transform_indices = @transform_2, window_bounds = array<i64: 8, 1>}, {pipeline_mode = #tpu.pipeline_mode<synchronous>, transform_indices = @transform_3, window_bounds = array<i64: 8, 1>}, {transform_indices = @transform_4, window_bounds = array<i64: 1>}, {transform_indices = @transform_5, window_bounds = array<i64: 1, 8>}]} {
    %c0 = arith.constant 0 : index
    %c0_0 = arith.constant 0 : index
    %0 = vector.load %arg2[%c0, %c0_0] : memref<8x6xf32, #tpu.memory_space<vmem>>, vector<8x6xf32>
    %c0_1 = arith.constant 0 : index
    %c0_2 = arith.constant 0 : index
    %1 = vector.load %arg1[%c0_1, %c0_2] : memref<8x6xf32, #tpu.memory_space<vmem>>, vector<8x6xf32>
    %cst = arith.constant dense<0.000000e+00> : vector<8x8xf32>
    %2 = tpu.matmul %0, %1, %cst {dimension_numbers = #tpu.dot_dimension_numbers<[1], [1], [0], [0], [0, 0, 1, 0], [], []>} : vector<8x6xf32>, vector<8x6xf32>, vector<8x8xf32> -> vector<8x8xf32>
    %c0_3 = arith.constant 0 : index
    %c0_4 = arith.constant 0 : index
    %3 = vector.load %arg3[%c0_3, %c0_4] : memref<8x1xf32, #tpu.memory_space<vmem>>, vector<8x1xf32>
    %4 = vector.broadcast %3 : vector<8x1xf32> to vector<8x8xf32>
    %5 = arith.addf %2, %4 : vector<8x8xf32>
    %cst_5 = arith.constant 0.000000e+00 : f32
    %6 = vector.broadcast %cst_5 : f32 to vector<8x8xf32>
    %7 = arith.maximumf %5, %6 : vector<8x8xf32>
    %c0_6 = arith.constant 0 : index
    %c0_7 = arith.constant 0 : index
    %8 = vector.load %arg4[%c0_6, %c0_7] : memref<8x1xf32, #tpu.memory_space<vmem>>, vector<8x1xf32>
    %9 = vector.broadcast %8 : vector<8x1xf32> to vector<8x8xf32>
    %10 = arith.mulf %7, %9 : vector<8x8xf32>
    %cst_8 = arith.constant dense<0.000000e+00> : vector<8xf32>
    %11 = vector.multi_reduction <add>, %10, %cst_8 [0] : vector<8x8xf32> to vector<8xf32>
    %12 = vector.shape_cast %11 : vector<8xf32> to vector<1x8xf32>
    %c0_9 = arith.constant 0 : index
    %13 = memref.load %arg5[%c0_9] : memref<1xf32, #tpu.memory_space<smem>>
    %14 = vector.broadcast %13 : f32 to vector<1x8xf32>
    %15 = arith.addf %12, %14 : vector<1x8xf32>
    %16 = arith.negf %15 : vector<1x8xf32>
    %17 = math.exp %16 : vector<1x8xf32>
    %cst_10 = arith.constant 1.000000e+00 : f32
    %18 = vector.broadcast %cst_10 : f32 to vector<1x8xf32>
    %19 = arith.addf %18, %17 : vector<1x8xf32>
    %20 = arith.divf %18, %19 : vector<1x8xf32>
    %c0_11 = arith.constant 0 : index
    %c0_12 = arith.constant 0 : index
    %21 = vector.load %arg6[%c0_11, %c0_12] : memref<1x8xf32, #tpu.memory_space<vmem>>, vector<1x8xf32>
    tpu.vector_store %arg6[%c0_11, %c0_12], %20 {strides = array<i32>} : memref<1x8xf32, #tpu.memory_space<vmem>>, vector<1x8xf32>,
    return
  }
  func.func @transform_0(%arg0: i32) -> (i32, i32) {
    %c0_i32 = arith.constant 0 : i32
    %c0_i32_0 = arith.constant 0 : i32
    return %arg0, %c0_i32 : i32, i32
  }
  func.func @transform_1(%arg0: i32) -> (i32, i32) {
    %c0_i32 = arith.constant 0 : i32
    %c0_i32_0 = arith.constant 0 : i32
    %c0_i32_1 = arith.constant 0 : i32
    return %c0_i32, %c0_i32_0 : i32, i32
  }
  func.func @transform_2(%arg0: i32) -> (i32, i32) {
    %c0_i32 = arith.constant 0 : i32
    %c0_i32_0 = arith.constant 0 : i32
    %c0_i32_1 = arith.constant 0 : i32
    return %c0_i32, %c0_i32_0 : i32, i32
  }
  func.func @transform_3(%arg0: i32) -> (i32, i32) {
    %c0_i32 = arith.constant 0 : i32
    %c0_i32_0 = arith.constant 0 : i32
    %c0_i32_1 = arith.constant 0 : i32
    return %c0_i32, %c0_i32_0 : i32, i32
  }
  func.func @transform_4(%arg0: i32) -> i32 {
    %c0_i32 = arith.constant 0 : i32
    %c0_i32_0 = arith.constant 0 : i32
    return %c0_i32 : i32
  }
  func.func @transform_5(%arg0: i32) -> (i32, i32) {
    %c0_i32 = arith.constant 0 : i32
    %c0_i32_0 = arith.constant 0 : i32
    return %c0_i32, %arg0 : i32, i32
  }
}

</mosaic_0001>

<llo_original>
// kernel: binary_claim_verification_forward.1
$region0: #{binary_claim_verification_forward.1}
  #allocation0 [shape = 'u32[]', space=smem, size = 0x4, offset = 0x4, fixed_abs, tag = 'smem constant byte address 0x4 - core index']
  #allocation1 [shape = 'u32[72,128]{1,0:T(1,128)}', space=vmem, size = 0x9000, scoped, tag = 'internal scratch']
  #allocation2 [shape = 'f32[1]{0:T(128)S(6)}', space=smem, size = 0x200, scoped, tag = 'scoped memory for binary_claim_verification_forward.1']
  %s0 = inlined_call_operand.vmem [shape: f32[8,6], index: 0, kind: input, shape index: {}]
  %s1 = inlined_call_operand.vmem [shape: f32[8,6], index: 1, kind: input, shape index: {}]
  %s2 = inlined_call_operand.vmem [shape: f32[8,1], index: 2, kind: input, shape index: {}]
  %s3 = inlined_call_operand.vmem [shape: f32[8,1], index: 3, kind: input, shape index: {}]
  %s4 = inlined_call_operand.<no memory space> [shape: f32[1], index: 4, kind: input, shape index: {}]
  %s5 = inlined_call_operand.hbm [shape: f32[1,8], index: 5, kind: output, shape index: {}]
  %s6 = sld [smem:[#allocation0]]
  $region30: #{binary_claim_verification_forward.1} parent=0
    _
  %s8 = ssub.s32 1, %s6
  %s9 = scalar_select 0, %s8, %s6
  %10 = sst [smem:[#allocation2]] %s4
  $region1: #{binary_claim_verification_forward.1} parent=0
    #allocation3 [shape = 'u8[512]{0}', space=vmem, size = 0x400, scoped, tag = 'output window, operand 0, single buffered']
    #allocation4 [shape = 's32[1]{0}', space=sflag, size = 0x4, scoped, tag = 'scoped memory for binary_claim_verification_forward.1']
    %11 = vsyncpa [#allocation4], 0
    // Predicated region
    $region2: #{binary_claim_verification_forward.1} parent=1 // pred_check
      _
    $region3: #{binary_claim_verification_forward.1} parent=1 // pred_check_branch
      %13 = sbr.rel (0) target = $region5
    $region4: #{binary_claim_verification_forward.1} parent=1 // pred_region
      _
    $region5: #{binary_claim_verification_forward.1} parent=1 // pred_fallthru
      _
    // Predicated region
    $region6: #{binary_claim_verification_forward.1} parent=1 // pred_check
      _
    $region7: #{binary_claim_verification_forward.1} parent=1 // pred_check_branch
      %15 = sbr.rel (0) target = $region9
    $region8: #{binary_claim_verification_forward.1} parent=1 // pred_region
      _
    $region9: #{binary_claim_verification_forward.1} parent=1 // pred_fallthru
      _
    // Predicated region
    $region10: #{binary_claim_verification_forward.1} parent=1 // pred_check
      _
    $region11: #{binary_claim_verification_forward.1} parent=1 // pred_check_branch
      %17 = sbr.rel (0) target = $region13
    $region12: #{binary_claim_verification_forward.1} parent=1 // pred_region
      _
    $region13: #{binary_claim_verification_forward.1} parent=1 // pred_fallthru
      _
    // Predicated region
    $region14: #{binary_claim_verification_forward.1} parent=1 // pred_check
      _
    $region15: #{binary_claim_verification_forward.1} parent=1 // pred_check_branch
      %19 = sbr.rel (0) target = $region17
    $region16: #{binary_claim_verification_forward.1} parent=1 // pred_region
      _
    $region17: #{binary_claim_verification_forward.1} parent=1 // pred_fallthru
      _
    // Predicated region
    $region18: #{binary_claim_verification_forward.1} parent=1 // pred_check
      _
    $region19: #{binary_claim_verification_forward.1} parent=1 // pred_check_branch
      %21 = sbr.rel (0) target = $region21
    $region20: #{binary_claim_verification_forward.1} parent=1 // pred_region
      _
    $region21: #{binary_claim_verification_forward.1} parent=1 // pred_fallthru
      _
    %v22 = vld [vmem:[%s1] sm:$0xff]
    %v23 = vld [vmem:[%s0] sm:$0xff]
    %v24 = vld [vmem:[%s2] sm:$0xff]
    %26 = vset.pattern.permute.xlu0 0
    %27 = vperm.xlu0 %26, %v24
    %v28 = vpop.permute.xlu0 %27
    %vm30 = vcmask 48128
    %v32 = vsel %vm30, %v22, 0
    %v35 = vsel %vm30, %v23, 0
    %37 = vmatpush.xpose.msra.mxu0 0.0
    %38 = vmatpush.xpose.msra.mxu0 0.0
    %39 = vmatpush.xpose.msra.mxu0 0.0
    %40 = vmatpush.xpose.msra.mxu0 0.0
    %41 = vmatpush.xpose.msra.mxu0 0.0
    %42 = vmatpush.xpose.msra.mxu0 0.0
    %43 = vmatpush.xpose.msra.mxu0 0.0
    %44 = vmatpush.xpose.msra.mxu0 0.0
    %45 = vmatpush.xpose.msra.mxu0 0.0
    %46 = vmatpush.xpose.msra.mxu0 0.0
    %47 = vmatpush.xpose.msra.mxu0 0.0
    %48 = vmatpush.xpose.msra.mxu0 0.0
    %49 = vmatpush.xpose.msra.mxu0 0.0
    %50 = vmatpush.xpose.msra.mxu0 0.0
    %51 = vmatpush.xpose.msra.mxu0 0.0
    %52 = vmatpush.xpose.msra.mxu0 %v35
    %53 = vmatmul.f32.gmra.mxu0 %v32
    %v54 = vpop.f32.mrf.mxu0
    %v55 = vadd.f32 %v28, %v54
    %56 = vdwg.mxu0
    %v57 = vmax.f32 %v55, 0.0
    %v58 = vld [vmem:[%s3] sm:$0xff]
    %60 = vset.pattern.permute.xlu0 0
    %61 = vperm.xlu0 %60, %v58
    %v62 = vpop.permute.xlu0 %61
    %v64 = vmul.f32 %v57, %v62
    %vm65 = vcmask 64512
    %v66 = vsel %vm65, %v64, 0.0
    %v67 = vrot.slane %v66, 4
    %v68 = vadd.f32 %v66, %v67
    %v69 = vrot.slane %v68, 2
    %v70 = vadd.f32 %v68, %v69
    %v71 = vrot.slane %v70, 1
    %v72 = vadd.f32 %v70, %v71
    %s73 = sld [smem:[#allocation2]]
    %v74 = vstv %s73
    %v75 = vadd.f32 %v72, %v74
    %v76 = vxor.u32 %v75, 2147483648
    %v77 = vmul.f32 %v76, 1.442695
    %v78 = vpow.pop %v77
    %v79 = vadd.f32 %v78, 1.0
    %v80 = vrcp.pop %v79
    %v81 = vmul.f32 %v79, %v80
    %v82 = vsub.f32 1.0, %v81
    %v83 = vmul.f32 %v80, %v82
    %v84 = vadd.f32 %v80, %v83
    %vm85 = vweird.f32 %v79
    %vm86 = vweird.f32 %v80
    %vm87 = vmor %vm85, %vm86
    %v88 = vsel %vm87, %v80, %v84
    %v89 = vand.u32 2147483647, %v79
    %vm90 = vcmp.eq.f32.partialorder %v89, 8.507059e+37
    %v91 = vand.u32 %v79, 2147483648
    %v92 = vor.u32 1.1754944e-38, %v91
    %v93 = vsel %vm90, %v92, %v88
    %v94 = vmul.f32 1.0, %v93
    %vm95 = vcmask 57344
    %96 = vst.msk [vmem:[#allocation3] sm:$0x1] %vm95, %v94
    // Predicated region
    $region22: #{binary_claim_verification_forward.1} parent=1 // pred_check
      _
    $region23: #{binary_claim_verification_forward.1} parent=1 // pred_check_branch
      %98 = sbr.rel (0) target = $region25
    $region24: #{binary_claim_verification_forward.1} parent=1 // pred_region
      %100 = vsyncadd [#allocation4], 0
      %s102 = sshll.u32 [#allocation3], 4
      %s103 = int_to_ptr.vmem [resolvable:$true] %s102
      %s104 = sshll.u32 %s5, 4
      %s105 = int_to_ptr.hbm [resolvable:$true] %s104
      %107 = dma.vmem_to_hbm [thread:$0]  %s103, 16, %s105, [#allocation4]
    $region25: #{binary_claim_verification_forward.1} parent=1 // pred_fallthru
      _
    // Predicated region
    $region26: #{binary_claim_verification_forward.1} parent=1 // pred_check
      _
    $region27: #{binary_claim_verification_forward.1} parent=1 // pred_check_branch
      %109 = sbr.rel (0) target = $region29
    $region28: #{binary_claim_verification_forward.1} parent=1 // pred_region
      %111 = dma.done [#allocation4], 16
    $region29: #{binary_claim_verification_forward.1} parent=1 // pred_fallthru
      _
    %112 = vsyncpa [#allocation4], 1

</llo_original>
